<compile_context>
chip_gen: v7x
topology: tpu7x:2x2x1
jax: 0.10.0
libtpu: 0.0.40
codegen_flags: <defaults>
</compile_context>

<pallas_src>
import re
from functools import partial

import jax
import jax.numpy as jnp
from jax.experimental import pallas as pl
from jax.experimental.pallas import tpu as pltpu


def _swish_kernel(x_ref, o_ref, *, compute_dtype):
    x = x_ref[...].astype(compute_dtype)
    t = 0.5 * x
    # sigmoid(x) = 0.5*(tanh(x/2)+1)  =>  swish(x) = t*(tanh(t)+1): one EUP op.
    o_ref[...] = (t * (jnp.tanh(t) + 1.0)).astype(o_ref.dtype)


def _vmem_capacity_bytes():
    """Per-core VMEM capacity; conservative (v7x-sized) fallback."""
    try:
        return int(pltpu.get_tpu_info().vmem_capacity_bytes)
    except Exception:
        return 64 * 1024 * 1024


def _native_bf16_compute_ok():
    """True on chips with bf16-capable VPU/EUP (v6e and newer)."""
    try:
        kind = jax.devices()[0].device_kind  # e.g. "TPU v6 lite"
        m = re.search(r"v(\d+)", kind)
        return m is not None and int(m.group(1)) >= 6
    except Exception:
        return False


def swish(x):
    """Elementwise Swish: x * sigmoid(x). Supports float32 / bfloat16 inputs."""
    orig_shape = x.shape
    dtype = x.dtype
    n = x.size
    if n == 0:
        return x

    itemsize = jnp.dtype(dtype).itemsize

    # Compute dtype: native bf16 on v6e/v7x, f32 everywhere else.
    if dtype == jnp.bfloat16 and _native_bf16_compute_ok():
        compute_dtype = jnp.bfloat16
    else:
        compute_dtype = jnp.float32

    # Generation-aware sizing: 2 arrays x 2 pipeline buffers -> block ~ limit/6
    # keeps ~1.5x headroom for compiler scratch.
    vmem_cap = _vmem_capacity_bytes()
    vmem_limit = min(vmem_cap // 2, 48 * 1024 * 1024)   # 48 MiB v5e/v6e, 32 MiB v7x
    block_bytes = max(512 * 1024, vmem_limit // 6)

    # Lane width: widest power-of-two multiple of 128 (<= 2048) dividing n
    # exactly (no padding in the common case); otherwise fall back to 128.
    lane = 128
    for cand in (2048, 1024, 512, 256, 128):
        if n % cand == 0:
            lane = cand
            break

    rows = pl.cdiv(n, lane)
    # Sublane packing granularity: 8 for 32-bit, 16 for bf16/f16.
    sub = max(8, 32 // itemsize)

    if rows <= sub:
        # Tiny input: one block equal to the full row extent (allowed since it
        # equals the array dim); megacore split is pointless at this size.
        block_rows = rows
    else:
        # Rows per block sized to ~block_bytes (amortizes ~0.35us/step), but
        # capped so we get at least ~4 grid steps (>= 2) so the "parallel"
        # axis can be sharded across both v7x TensorCores.
        bytes_rows = max(sub, (block_bytes // (lane * itemsize)) // sub * sub)
        desired_steps = min(4, pl.cdiv(rows, sub))
        split_rows = max(sub, (rows // desired_steps) // sub * sub)
        block_rows = min(bytes_rows, split_rows)

    grid = (pl.cdiv(rows, block_rows),)

    # Only pad up to the lane multiple (<= lane-1 elements, ragged shapes only).
    # The partial final ROW block is handled by Pallas masking, not padding.
    n_slab = rows * lane
    flat = x.reshape(-1)
    padded = n_slab != n
    if padded:
        # swish(0) == 0, and the padded tail is sliced off anyway.
        flat = jnp.pad(flat, (0, n_slab - n))
    slab = flat.reshape(rows, lane)

    out = pl.pallas_call(
        partial(_swish_kernel, compute_dtype=compute_dtype),
        out_shape=jax.ShapeDtypeStruct((rows, lane), dtype),
        grid_spec=pltpu.PrefetchScalarGridSpec(
            num_scalar_prefetch=0,
            grid=grid,
            in_specs=[pl.BlockSpec((block_rows, lane), lambda i: (i, 0))],
            out_specs=pl.BlockSpec((block_rows, lane), lambda i: (i, 0)),
        ),
        compiler_params=pltpu.CompilerParams(
            dimension_semantics=("parallel",),
            vmem_limit_bytes=vmem_limit,
        ),
    )(slab)

    if padded:
        return out.reshape(-1)[:n].reshape(orig_shape)
    return out.reshape(orig_shape)


if __name__ == "__main__":
    key = jax.random.PRNGKey(0)
    k1, k2, k3 = jax.random.split(key, 3)

    # Small NCHW input consistent with typical use of Swish inside conv nets.
    x = jax.random.normal(k1, (2, 4, 16, 16), dtype=jnp.float32)
    y = swish(x)
    jax.block_until_ready(y)
    y_ref = x * jax.nn.sigmoid(x)
    assert y.shape == x.shape and y.dtype == x.dtype
    assert jnp.allclose(y, y_ref, atol=1e-5, rtol=1e-5)

    # Multi-block path with a masked (partial) final row block, no padding.
    x2 = jax.random.normal(k2, (4, 3, 40, 128), dtype=jnp.float32)
    y2 = swish(x2)
    jax.block_until_ready(y2)
    y2_ref = x2 * jax.nn.sigmoid(x2)
    assert y2.shape == x2.shape and jnp.allclose(y2, y2_ref, atol=1e-5, rtol=1e-5)

    # Ragged (non-128-divisible) shape -> small lane-pad path.
    x3 = jax.random.normal(k3, (3, 5, 7), dtype=jnp.float32)
    y3 = swish(x3)
    jax.block_until_ready(y3)
    y3_ref = x3 * jax.nn.sigmoid(x3)
    assert y3.shape == x3.shape and jnp.allclose(y3, y3_ref, atol=1e-5, rtol=1e-5)

    # bfloat16 input (native bf16 compute on v6e/v7x, f32 upcast on v5e).
    xb = jax.random.normal(k1, (2, 4, 16, 16), dtype=jnp.float32).astype(jnp.bfloat16)
    yb = swish(xb)
    jax.block_until_ready(yb)
    yb_ref = (xb.astype(jnp.float32) * jax.nn.sigmoid(xb.astype(jnp.float32))).astype(jnp.bfloat16)
    assert yb.shape == xb.shape and yb.dtype == jnp.bfloat16
    assert jnp.allclose(yb.astype(jnp.float32), yb_ref.astype(jnp.float32), atol=2e-2, rtol=2e-2)

    print("KERNEL_OK")
</pallas_src>

<mosaic_0001>
module attributes {stable_mosaic.version = 11 : i64} {
  func.func @_swish_kernel(%arg0: i32, %arg1: memref<1x2048xf32, #tpu.memory_space<vmem>>, %arg2: memref<1x2048xf32, #tpu.memory_space<vmem>>) attributes {dimension_semantics = [#tpu.dimension_semantics<parallel>], iteration_bounds = array<i64: 1>, scalar_prefetch = 0 : i64, scratch_operands = 0 : i64, tpu.core_type = #tpu.core_type<tc>, window_params = [{transform_indices = @transform_0, window_bounds = array<i64: 1, 2048>}, {transform_indices = @transform_1, window_bounds = array<i64: 1, 2048>}]} {
    %c0 = arith.constant 0 : index
    %c0_0 = arith.constant 0 : index
    %0 = vector.load %arg1[%c0, %c0_0] : memref<1x2048xf32, #tpu.memory_space<vmem>>, vector<1x2048xf32>
    %cst = arith.constant 5.000000e-01 : f32
    %1 = vector.broadcast %cst : f32 to vector<1x2048xf32>
    %2 = arith.mulf %1, %0 : vector<1x2048xf32>
    %3 = math.tanh %2 : vector<1x2048xf32>
    %cst_1 = arith.constant 1.000000e+00 : f32
    %4 = vector.broadcast %cst_1 : f32 to vector<1x2048xf32>
    %5 = arith.addf %3, %4 : vector<1x2048xf32>
    %6 = arith.mulf %2, %5 : vector<1x2048xf32>
    %c0_2 = arith.constant 0 : index
    %c0_3 = arith.constant 0 : index
    %7 = vector.load %arg2[%c0_2, %c0_3] : memref<1x2048xf32, #tpu.memory_space<vmem>>, vector<1x2048xf32>
    tpu.vector_store %arg2[%c0_2, %c0_3], %6 {strides = array<i32>} : memref<1x2048xf32, #tpu.memory_space<vmem>>, vector<1x2048xf32>,
    return
  }
  func.func @transform_0(%arg0: i32) -> (i32, i32) {
    %c0_i32 = arith.constant 0 : i32
    %c0_i32_0 = arith.constant 0 : i32
    return %arg0, %c0_i32 : i32, i32
  }
  func.func @transform_1(%arg0: i32) -> (i32, i32) {
    %c0_i32 = arith.constant 0 : i32
    %c0_i32_0 = arith.constant 0 : i32
    return %arg0, %c0_i32 : i32, i32
  }
}

</mosaic_0001>

<llo_original>
// kernel: tpu_custom_call.1
$region0: #{tpu_custom_call.1}
  #allocation0 [shape = 'u32[]', space=smem, size = 0x4, offset = 0x4, fixed_abs, tag = 'smem constant byte address 0x4 - core index']
  #allocation1 [shape = 'u32[144,128]{1,0:T(1,128)}', space=vmem, size = 0x12000, scoped, tag = 'internal scratch']
  %s0 = inlined_call_operand.hbm [shape: f32[1,2048], index: 0, kind: input, shape index: {}]
  %s1 = inlined_call_operand.hbm [shape: f32[1,2048], index: 1, kind: output, shape index: {}]
  %s2 = sld [smem:[#allocation0]]
  $region18: #{tpu_custom_call.1} parent=0
    _
  %s4 = ssub.s32 1, %s2
  %s5 = scalar_select 0, %s4, %s2
  $region1: #{tpu_custom_call.1} parent=0
    #allocation2 [shape = 'u8[8192]{0}', space=vmem, size = 0x2000, scoped, tag = 'input window, operand 0, single buffered']
    #allocation3 [shape = 's32[1]{0}', space=sflag, size = 0x4, scoped, tag = 'scoped memory for tpu_custom_call.1']
    #allocation4 [shape = 's32[1]{0}', space=sflag, size = 0x4, scoped, tag = 'scoped memory for tpu_custom_call.1']
    #allocation5 [shape = 'u8[8192]{0}', space=vmem, size = 0x2000, scoped, tag = 'output window, operand 0, single buffered']
    %6 = vsyncpa [#allocation3], 0
    %7 = vsyncpa [#allocation4], 0
    // Predicated region
    $region2: #{tpu_custom_call.1} parent=1 // pred_check
      _
    $region3: #{tpu_custom_call.1} parent=1 // pred_check_branch
      %9 = sbr.rel (0) target = $region5
    $region4: #{tpu_custom_call.1} parent=1 // pred_region
      %s11 = ssub.s32 256, 256
      %12 = vsyncadd [#allocation3], %s11
      %s14 = sshll.u32 [#allocation2], 4
      %s15 = int_to_ptr.vmem [resolvable:$true] %s14
      %17 = dma.hbm_to_vmem [thread:$0]  %s0, 256, %s15, [#allocation3]
    $region5: #{tpu_custom_call.1} parent=1 // pred_fallthru
      _
    // Predicated region
    $region6: #{tpu_custom_call.1} parent=1 // pred_check
      _
    $region7: #{tpu_custom_call.1} parent=1 // pred_check_branch
      %19 = sbr.rel (0) target = $region9
    $region8: #{tpu_custom_call.1} parent=1 // pred_region
      %20 = dma.done [#allocation3], 256
    $region9: #{tpu_custom_call.1} parent=1 // pred_fallthru
      _
    %v21 = vld [vmem:[#allocation2] sm:$0xff]
    %v22 = vld [vmem:[#allocation2 + $0x8] sm:$0xff]
    %v23 = vmul.f32 %v21, 0.5
    %v24 = vmul.f32 %v22, 0.5
    %v25 = vtanh.pop %v23
    %v26 = vtanh.pop %v24
    %v27 = vadd.f32 %v25, 1.0
    %v28 = vadd.f32 %v26, 1.0
    %v29 = vmul.f32 %v23, %v27
    %v30 = vmul.f32 %v24, %v28
    %31 = vst [vmem:[#allocation5] sm:$0xff] %v29
    %32 = vst [vmem:[#allocation5 + $0x8] sm:$0xff] %v30
    // Predicated region
    $region10: #{tpu_custom_call.1} parent=1 // pred_check
      _
    $region11: #{tpu_custom_call.1} parent=1 // pred_check_branch
      %34 = sbr.rel (0) target = $region13
    $region12: #{tpu_custom_call.1} parent=1 // pred_region
      %s36 = ssub.s32 256, 256
      %37 = vsyncadd [#allocation4], %s36
      %s39 = sshll.u32 [#allocation5], 4
      %s40 = int_to_ptr.vmem [resolvable:$true] %s39
      %42 = dma.vmem_to_hbm [thread:$0]  %s40, 256, %s1, [#allocation4]
    $region13: #{tpu_custom_call.1} parent=1 // pred_fallthru
      _
    // Predicated region
    $region14: #{tpu_custom_call.1} parent=1 // pred_check
      _
    $region15: #{tpu_custom_call.1} parent=1 // pred_check_branch
      %44 = sbr.rel (0) target = $region17
    $region16: #{tpu_custom_call.1} parent=1 // pred_region
      %45 = dma.done [#allocation4], 256
    $region17: #{tpu_custom_call.1} parent=1 // pred_fallthru
      _
    %46 = vsyncpa [#allocation3], 1
    %47 = vsyncpa [#allocation4], 1

</llo_original>
